<compile_context>
chip_gen: v7x
topology: tpu7x:2x2x1
jax: 0.10.0
libtpu: 0.0.40
codegen_flags: <defaults>
</compile_context>

<pallas_src>
import functools

import jax
import jax.numpy as jnp
from jax.experimental import pallas as pl
from jax.experimental.pallas import tpu as pltpu


_VMEM_BUDGET_BYTES = 40 * 1024 * 1024   # fits scoped VMEM on v5e/v6e/v7x


def _round_up(x, m):
    return ((x + m - 1) // m) * m


def _patch_embed_kernel(x_ref, w_ref, b_ref, o_ref):
    # x_ref: (tm, K)  patch rows (compute dtype)
    # w_ref: (K, Ep)  projection weight, resident across all grid steps
    # b_ref: (1, Ep)  bias, f32 epilogue
    # o_ref: (tm, Ep) output tile
    acc = jnp.dot(x_ref[...], w_ref[...], preferred_element_type=jnp.float32)
    o_ref[...] = (acc + b_ref[...]).astype(o_ref.dtype)


def pack_patch_embed_params(weight, bias, *, compute_dtype=jnp.bfloat16):
    """One-time (init-time) packing of the Conv2d weight/bias for the kernel.

    weight: (E, C, P, P) Conv2d layout -> (K, Ep) compute-dtype matrix with
            feature order (c, ph, pw); bias: (E,) -> (1, Ep) float32.
    E is zero-padded to a multiple of 128 so kernel stores are lane-dense.
    """
    E, C, P, P2 = weight.shape
    assert P == P2
    K = C * P * P
    Ep = _round_up(E, 128)
    w = weight.reshape(E, K).T.astype(compute_dtype)
    b = bias.reshape(1, E).astype(jnp.float32)
    if Ep != E:
        w = jnp.pad(w, ((0, 0), (0, Ep - E)))
        b = jnp.pad(b, ((0, 0), (0, Ep - E)))
    return w, b


def _vmem_bytes(tm, K, Ep, in_bytes, out_bytes, w_bytes):
    return (2 * tm * K * in_bytes      # double-buffered x tiles
            + 2 * tm * Ep * out_bytes  # double-buffered output tiles
            + K * Ep * w_bytes         # resident weight
            + 2 * Ep * 4)              # resident bias


def _choose_tm(M, block_m, K, Ep, in_bytes, out_bytes, w_bytes):
    gran = 16 if in_bytes < 4 else 8   # bf16 packs 2 rows per sublane
    if M <= gran:
        return M                       # single full-extent block (always legal)
    tm = max(gran, (min(block_m, M) // gran) * gran)
    if pl.cdiv(M, tm) < 2:
        # Keep >= 2 grid steps so the "parallel" M axis can shard across
        # v7x's two TensorCores.
        tm = max(gran, _round_up(-(-M // 2), gran))
    while (tm > gran and
           _vmem_bytes(tm, K, Ep, in_bytes, out_bytes, w_bytes) > _VMEM_BUDGET_BYTES):
        tm = max(gran, ((tm // 2) // gran) * gran)
    return tm


def patch_embedding(x, w_packed, b_packed, *, patch_size, embed_dim,
                    block_m=2048, out_dtype=None):
    """Equivalent of PatchEmbedding.forward.

    x:        (B, C, H, W) NCHW, like PyTorch.
    w_packed: (K, Ep)  from pack_patch_embed_params (compute dtype).
    b_packed: (1, Ep)  from pack_patch_embed_params (float32).
    returns   (B, n_patches, embed_dim) in out_dtype (default: compute dtype).
    """
    B, C, H, W = x.shape
    P = patch_size
    assert H % P == 0 and W % P == 0, "H and W must be divisible by patch_size"
    Hp, Wp = H // P, W // P
    n_patches = Hp * Wp
    K = C * P * P
    M = B * n_patches
    Kw, Ep = w_packed.shape
    assert Kw == K and Ep % 128 == 0 and Ep >= embed_dim
    compute_dtype = w_packed.dtype
    out_dtype = compute_dtype if out_dtype is None else out_dtype

    # im2col: NCHW -> (M, K) in the compute dtype, feature order (c, ph, pw)
    # matching the packed Conv2d weight.  Under jit this is a single fused
    # convert+transpose pass over x (no separate pad passes; see header).
    xp = x.astype(compute_dtype).reshape(B, C, Hp, P, Wp, P)
    xp = jnp.transpose(xp, (0, 2, 4, 1, 3, 5)).reshape(M, K)

    in_bytes = jnp.dtype(compute_dtype).itemsize
    out_bytes = jnp.dtype(out_dtype).itemsize
    tm = _choose_tm(M, block_m, K, Ep, in_bytes, out_bytes, in_bytes)
    grid_m = pl.cdiv(M, tm)

    cost = pl.CostEstimate(
        flops=2 * M * K * Ep,
        transcendentals=0,
        bytes_accessed=(M * K * in_bytes + K * Ep * in_bytes + Ep * 4
                        + M * Ep * out_bytes),
    )

    out = pl.pallas_call(
        _patch_embed_kernel,
        out_shape=jax.ShapeDtypeStruct((M, Ep), out_dtype),
        grid_spec=pltpu.PrefetchScalarGridSpec(
            num_scalar_prefetch=0,
            grid=(grid_m,),
            in_specs=[
                pl.BlockSpec((tm, K), lambda i: (i, 0)),   # patch rows: tiled
                pl.BlockSpec((K, Ep), lambda i: (0, 0)),   # weight: resident
                pl.BlockSpec((1, Ep), lambda i: (0, 0)),   # bias: resident
            ],
            out_specs=pl.BlockSpec((tm, Ep), lambda i: (i, 0)),
        ),
        compiler_params=pltpu.CompilerParams(
            dimension_semantics=("parallel",),
            vmem_limit_bytes=_VMEM_BUDGET_BYTES + (8 << 20),
        ),
        cost_estimate=cost,
    )(xp, w_packed, b_packed)

    if Ep != embed_dim:
        out = out[:, :embed_dim]
    return out.reshape(B, n_patches, embed_dim)


if __name__ == "__main__":
    # Small shapes consistent with the module.
    B, C, IMG, P, E = 2, 4, 16, 4, 32
    n_patches = (IMG // P) ** 2

    key = jax.random.PRNGKey(0)
    kx, kw, kb = jax.random.split(key, 3)
    x = jax.random.normal(kx, (B, C, IMG, IMG), dtype=jnp.float32)
    weight = jax.random.normal(kw, (E, C, P, P), dtype=jnp.float32) * 0.02
    bias = jax.random.normal(kb, (E,), dtype=jnp.float32) * 0.02

    # Pure-JAX reference (same math as Conv2d(stride=P) + flatten + transpose).
    xr = x.reshape(B, C, IMG // P, P, IMG // P, P)
    xr = jnp.transpose(xr, (0, 2, 4, 1, 3, 5)).reshape(B * n_patches, C * P * P)
    ref = (xr @ weight.reshape(E, -1).T + bias).reshape(B, n_patches, E)

    # --- f32 compute path: exercises a multi-step grid with a ragged last
    # block (M=32, tm=24 -> grid=2, last block masked).  Tight tolerance. ---
    w32, b32 = pack_patch_embed_params(weight, bias, compute_dtype=jnp.float32)
    run_f32 = jax.jit(functools.partial(
        patch_embedding, patch_size=P, embed_dim=E, block_m=24,
        out_dtype=jnp.float32))
    out_f32 = jax.block_until_ready(run_f32(x, w32, b32))
    assert out_f32.shape == (B, n_patches, E), out_f32.shape
    assert jnp.allclose(out_f32, ref, atol=1e-4, rtol=1e-4)

    # --- default bf16 compute path (f32 accumulation, bf16 output).  With the
    # default block_m the tile splitter still keeps >= 2 grid steps. ---
    wbf, bbf = pack_patch_embed_params(weight, bias)   # init-time packing
    run_bf16 = jax.jit(functools.partial(
        patch_embedding, patch_size=P, embed_dim=E))
    out_bf16 = jax.block_until_ready(run_bf16(x, wbf, bbf))
    assert out_bf16.shape == (B, n_patches, E), out_bf16.shape
    assert out_bf16.dtype == jnp.bfloat16, out_bf16.dtype
    assert jnp.allclose(out_bf16.astype(jnp.float32), ref, atol=3e-2, rtol=3e-2)

    print("KERNEL_OK")
</pallas_src>

<mosaic_0001>
module attributes {stable_mosaic.version = 11 : i64} {
  func.func @_patch_embed_kernel(%arg0: i32, %arg1: memref<24x64xf32, #tpu.memory_space<vmem>>, %arg2: memref<64x128xf32, #tpu.memory_space<vmem>>, %arg3: memref<1x128xf32, #tpu.memory_space<vmem>>, %arg4: memref<24x128xf32, #tpu.memory_space<vmem>>) attributes {dimension_semantics = [#tpu.dimension_semantics<parallel>], iteration_bounds = array<i64: 2>, scalar_prefetch = 0 : i64, scratch_operands = 0 : i64, tpu.core_type = #tpu.core_type<tc>, window_params = [{transform_indices = @transform_0, window_bounds = array<i64: 24, 64>}, {pipeline_mode = #tpu.pipeline_mode<synchronous>, transform_indices = @transform_1, window_bounds = array<i64: 64, 128>}, {pipeline_mode = #tpu.pipeline_mode<synchronous>, transform_indices = @transform_2, window_bounds = array<i64: 1, 128>}, {transform_indices = @transform_3, window_bounds = array<i64: 24, 128>}]} {
    %c0 = arith.constant 0 : index
    %c0_0 = arith.constant 0 : index
    %0 = vector.load %arg1[%c0, %c0_0] : memref<24x64xf32, #tpu.memory_space<vmem>>, vector<24x64xf32>
    %c0_1 = arith.constant 0 : index
    %c0_2 = arith.constant 0 : index
    %1 = vector.load %arg2[%c0_1, %c0_2] : memref<64x128xf32, #tpu.memory_space<vmem>>, vector<64x128xf32>
    %cst = arith.constant dense<0.000000e+00> : vector<24x128xf32>
    %2 = tpu.matmul %0, %1, %cst {dimension_numbers = #tpu.dot_dimension_numbers<[1], [0], [0], [1], [0, 0, 1, 1], [], []>} : vector<24x64xf32>, vector<64x128xf32>, vector<24x128xf32> -> vector<24x128xf32>
    %c0_3 = arith.constant 0 : index
    %c0_4 = arith.constant 0 : index
    %3 = vector.load %arg3[%c0_3, %c0_4] : memref<1x128xf32, #tpu.memory_space<vmem>>, vector<1x128xf32>
    %4 = vector.broadcast %3 : vector<1x128xf32> to vector<24x128xf32>
    %5 = arith.addf %2, %4 : vector<24x128xf32>
    %c0_5 = arith.constant 0 : index
    %c0_6 = arith.constant 0 : index
    %6 = vector.load %arg4[%c0_5, %c0_6] : memref<24x128xf32, #tpu.memory_space<vmem>>, vector<24x128xf32>
    tpu.vector_store %arg4[%c0_5, %c0_6], %5 {strides = array<i32>} : memref<24x128xf32, #tpu.memory_space<vmem>>, vector<24x128xf32>,
    return
  }
  func.func @transform_0(%arg0: i32) -> (i32, i32) {
    %c0_i32 = arith.constant 0 : i32
    %c0_i32_0 = arith.constant 0 : i32
    return %arg0, %c0_i32 : i32, i32
  }
  func.func @transform_1(%arg0: i32) -> (i32, i32) {
    %c0_i32 = arith.constant 0 : i32
    %c0_i32_0 = arith.constant 0 : i32
    %c0_i32_1 = arith.constant 0 : i32
    return %c0_i32, %c0_i32_0 : i32, i32
  }
  func.func @transform_2(%arg0: i32) -> (i32, i32) {
    %c0_i32 = arith.constant 0 : i32
    %c0_i32_0 = arith.constant 0 : i32
    %c0_i32_1 = arith.constant 0 : i32
    return %c0_i32, %c0_i32_0 : i32, i32
  }
  func.func @transform_3(%arg0: i32) -> (i32, i32) {
    %c0_i32 = arith.constant 0 : i32
    %c0_i32_0 = arith.constant 0 : i32
    return %arg0, %c0_i32 : i32, i32
  }
}

</mosaic_0001>

<llo_original>
// kernel: patch_embedding.1
$region0: #{patch_embedding.1}
  #allocation0 [shape = 'u32[]', space=smem, size = 0x4, offset = 0x4, fixed_abs, tag = 'smem constant byte address 0x4 - core index']
  #allocation1 [shape = 'u32[144,128]{1,0:T(1,128)}', space=vmem, size = 0x12000, scoped, tag = 'internal scratch']
  %s0 = inlined_call_operand.vmem [shape: f32[32,64], index: 0, kind: input, shape index: {}]
  %s1 = inlined_call_operand.vmem [shape: f32[64,128], index: 1, kind: input, shape index: {}]
  %s2 = inlined_call_operand.vmem [shape: f32[1,128], index: 2, kind: input, shape index: {}]
  %s3 = inlined_call_operand.hbm [shape: f32[32,128], index: 3, kind: output, shape index: {}]
  %s4 = sld [smem:[#allocation0]]
  $region45: #{patch_embedding.1} parent=0
    _
  %s6 = ssub.s32 1, %s4
  %s7 = scalar_select 0, %s6, %s4
  $region1: #{patch_embedding.1} parent=0
    #allocation2 [shape = 'u8[24576]{0}', space=vmem, size = 0x6000, scoped, tag = 'output window, operand 0']
    #allocation3 [shape = 's32[2]{0}', space=sflag, size = 0x8, scoped, tag = 'scoped memory for patch_embedding.1']
    %8 = vsyncpa [#allocation3], 0
    %s9 = scalar_lea.sflag [#allocation3], 1
    %10 = vsyncpa %s9, 0
    loop: start=0, step=1, limit=4
    $region2: #{patch_embedding.1} parent=1 // loop_pre_header
      _
    $region3: #{patch_embedding.1} parent=1 // loop_header
      %s12 = sphi 0, %s16
      %p13 = scmp.ge.s32.totalorder %s12, 4
      %s22 = sphi 0, %s24
      %s25 = sphi 0, %s22
      %s26 = sphi 0, %s25
      %s42 = sphi 0, %s26
      %s46 = sphi 0, %s46
      %s48 = sphi 0, %s46
      %s49 = sphi 0, %s48
      %s63 = sphi 0, %s49
      %s67 = sphi 0, %s67
      %s69 = sphi 0, %s67
      %s70 = sphi 0, %s69
      %s84 = sphi 0, %s70
      %s90 = sphi 0, %s92
      %s93 = sphi 0, %s90
      %s94 = sphi 0, %s93
      %s110 = sphi 0, %s94
    $region4: #{patch_embedding.1} parent=1 // loop_header_branch
      %15 = sbr.rel (%p13) target = $region8
    $region5: #{patch_embedding.1} parent=1 // loop_body
      %s17 = ssub.s32 %s12, 1
      %s18 = ssub.s32 %s12, 2
      %s19 = sadd.s32 %s12, 1
      %s20 = ssub.s32 %s12, %s19
      %p21 = scmp.eq.s32.totalorder %s20, 0
      %s23 = sadd.s32 %s22, 1
      %s24 = scalar_select %p21, %s22, %s23
      %p27 = pneg %p21
      %p28 = scmp.eq.s32.totalorder %s12, 1
      %p29 = por %p27, %p28
      %p30 = scmp.ne.s32.totalorder %s22, %s25
      %p31 = scmp.eq.s32.totalorder %s12, 0
      %p32 = por %p30, %p31
      %p33 = scmp.ne.s32.totalorder %s22, %s25
      %p34 = scmp.eq.s32.totalorder %s17, 1
      %p35 = por %p33, %p34
      %p36 = scmp.ne.s32.totalorder %s25, %s26
      %p37 = scmp.eq.s32.totalorder %s17, 0
      %p38 = por %p36, %p37
      %p39 = scmp.ne.s32.totalorder %s25, %s26
      %p40 = scmp.eq.s32.totalorder %s18, 1
      %p41 = por %p39, %p40
      %p43 = scmp.ne.s32.totalorder %s26, %s42
      %p44 = scmp.eq.s32.totalorder %s18, 0
      %p45 = por %p43, %p44
      %s47 = sadd.s32 %s46, 1
      %p50 = scmp.eq.s32.totalorder %s12, 1
      %p51 = scmp.ne.s32.totalorder %s46, %s48
      %p52 = scmp.eq.s32.totalorder %s12, 0
      %p53 = por %p51, %p52
      %p54 = scmp.ne.s32.totalorder %s46, %s48
      %p55 = scmp.eq.s32.totalorder %s17, 1
      %p56 = por %p54, %p55
      %p57 = scmp.ne.s32.totalorder %s48, %s49
      %p58 = scmp.eq.s32.totalorder %s17, 0
      %p59 = por %p57, %p58
      %p60 = scmp.ne.s32.totalorder %s48, %s49
      %p61 = scmp.eq.s32.totalorder %s18, 1
      %p62 = por %p60, %p61
      %p64 = scmp.ne.s32.totalorder %s49, %s63
      %p65 = scmp.eq.s32.totalorder %s18, 0
      %p66 = por %p64, %p65
      %s68 = sadd.s32 %s67, 1
      %p71 = scmp.eq.s32.totalorder %s12, 1
      %p72 = scmp.ne.s32.totalorder %s67, %s69
      %p73 = scmp.eq.s32.totalorder %s12, 0
      %p74 = por %p72, %p73
      %p75 = scmp.ne.s32.totalorder %s67, %s69
      %p76 = scmp.eq.s32.totalorder %s17, 1
      %p77 = por %p75, %p76
      %p78 = scmp.ne.s32.totalorder %s69, %s70
      %p79 = scmp.eq.s32.totalorder %s17, 0
      %p80 = por %p78, %p79
      %p81 = scmp.ne.s32.totalorder %s69, %s70
      %p82 = scmp.eq.s32.totalorder %s18, 1
      %p83 = por %p81, %p82
      %p85 = scmp.ne.s32.totalorder %s70, %s84
      %p86 = scmp.eq.s32.totalorder %s18, 0
      %p87 = por %p85, %p86
      %s88 = ssub.s32 %s12, %s19
      %p89 = scmp.eq.s32.totalorder %s88, 0
      %s91 = sadd.s32 %s90, 1
      %s92 = scalar_select %p89, %s90, %s91
      %p95 = pneg %p89
      %p96 = scmp.eq.s32.totalorder %s12, 1
      %p97 = por %p95, %p96
      %p98 = scmp.ne.s32.totalorder %s90, %s93
      %p99 = scmp.eq.s32.totalorder %s12, 0
      %p100 = por %p98, %p99
      %p101 = scmp.ne.s32.totalorder %s90, %s93
      %p102 = scmp.eq.s32.totalorder %s17, 1
      %p103 = por %p101, %p102
      %p104 = scmp.ne.s32.totalorder %s93, %s94
      %p105 = scmp.eq.s32.totalorder %s17, 0
      %p106 = por %p104, %p105
      %p107 = scmp.ne.s32.totalorder %s93, %s94
      %p108 = scmp.eq.s32.totalorder %s18, 1
      %p109 = por %p107, %p108
      %p111 = scmp.ne.s32.totalorder %s94, %s110
      %p112 = scmp.eq.s32.totalorder %s18, 0
      %p113 = por %p111, %p112
      %p114 = scmp.le.s32.totalorder 1, %s12
      %p115 = scmp.lt.s32.totalorder %s12, 3
      %p116 = pnand %p114, %p115
      %p117 = pneg %p116
      // Predicated region
      $region9: #{patch_embedding.1} parent=5 // pred_check
        _
      $region10: #{patch_embedding.1} parent=5 // pred_check_branch
        %119 = sbr.rel (%p116) target = $region12
      $region11: #{patch_embedding.1} parent=5 // pred_region
        %s120 = ssub.s32 %s12, 1
        // Predicated region
        $region13: #{patch_embedding.1} parent=11 // pred_check
          %p121 = pneg %p59
        $region14: #{patch_embedding.1} parent=11 // pred_check_branch
          %123 = sbr.rel (%p121) target = $region16
        $region15: #{patch_embedding.1} parent=11 // pred_region
          _
        $region16: #{patch_embedding.1} parent=11 // pred_fallthru
          _
        // Predicated region
        $region17: #{patch_embedding.1} parent=11 // pred_check
          %p124 = pneg %p80
        $region18: #{patch_embedding.1} parent=11 // pred_check_branch
          %126 = sbr.rel (%p124) target = $region20
        $region19: #{patch_embedding.1} parent=11 // pred_region
          _
        $region20: #{patch_embedding.1} parent=11 // pred_fallthru
          _
      $region12: #{patch_embedding.1} parent=5 // pred_fallthru
        _
      %p127 = scmp.lt.s32.totalorder %s12, 2
      // Predicated region
      $region21: #{patch_embedding.1} parent=5 // pred_check
        %p128 = pneg %p127
      $region22: #{patch_embedding.1} parent=5 // pred_check_branch
        %130 = sbr.rel (%p128) target = $region24
      $region23: #{patch_embedding.1} parent=5 // pred_region
        // Predicated region
        $region25: #{patch_embedding.1} parent=23 // pred_check
          %p131 = pneg %p32
        $region26: #{patch_embedding.1} parent=23 // pred_check_branch
          %133 = sbr.rel (%p131) target = $region28
        $region27: #{patch_embedding.1} parent=23 // pred_region
          %s134 = smul.u32 3, %s12
          %s135 = ssub.s32 4, %s134
          %p136 = scmp.lt.s32.totalorder %s135, 3
          %s137 = scalar_select %p136, %s135, 3
          %s138 = smul.u32 128, %s137
          %p139 = scmp.lt.s32.totalorder %s134, 3
          %s140 = scalar_select %p139, %s134, 3
          %s141 = smul.addr %s140, 8
          %s142 = scalar_lea.vmem %s0, %s141
          %s143 = smul.u32 3, %s12
          %s144 = ssub.s32 4, %s143
          %p145 = scmp.lt.s32.totalorder %s144, 3
          %s146 = scalar_select %p145, %s144, 3
          %s147 = smul.u32 128, %s146
        $region28: #{patch_embedding.1} parent=23 // pred_fallthru
          _
      $region24: #{patch_embedding.1} parent=5 // pred_fallthru
        _
      %p148 = scmp.le.s32.totalorder 1, %s12
      %p149 = scmp.lt.s32.totalorder %s12, 3
      %p150 = pnand %p148, %p149
      %p151 = pneg %p150
      // Predicated region
      $region29: #{patch_embedding.1} parent=5 // pred_check
        _
      $region30: #{patch_embedding.1} parent=5 // pred_check_branch
        %153 = sbr.rel (%p150) target = $region32
      $region31: #{patch_embedding.1} parent=5 // pred_region
        %s154 = ssub.s32 %s12, 1
        %s155 = smul.u32 3, %s17
        %s156 = ssub.s32 4, %s155
        %p157 = scmp.lt.s32.totalorder %s156, 3
        %s158 = scalar_select %p157, %s156, 3
        %s159 = smul.u32 128, %s158
        %p160 = scmp.lt.s32.totalorder %s155, 3
        %s161 = scalar_select %p160, %s155, 3
        %s162 = smul.addr %s161, 8
        %s163 = scalar_lea.vmem %s0, %s162
        %p164 = pneg %p38
        %p165 = pneg %p35
        %p166 = pneg %p59
        %p167 = pneg %p56
        %p168 = pneg %p80
        %p169 = pneg %p77
        %p170 = pneg %p106
        %p171 = pneg %p103
        %s172 = sand.u32 %s93, 1
        %s173 = scalar_lea.sflag [#allocation3], %s172
        %s174 = sand.u32 %s93, 1
        %s175 = smul.addr %s174, 24
        %s176 = scalar_lea.vmem [#allocation2], %s175
        %s177 = smul.u32 3, %s17
        %s178 = ssub.s32 4, %s177
        %p179 = scmp.lt.s32.totalorder %s178, 3
        %s180 = scalar_select %p179, %s178, 3
        %s181 = smul.u32 128, %s180
        %p182 = scmp.lt.s32.totalorder %s177, 3
        %s183 = scalar_select %p182, %s177, 3
        %s184 = smul.addr %s183, 8
        %s185 = scalar_lea.vmem %s0, %s184
        %s186 = smul.u32 3, %s17
        %s187 = ssub.s32 4, %s186
        %p188 = scmp.lt.s32.totalorder %s187, 3
        %s189 = scalar_select %p188, %s187, 3
        %s190 = smul.u32 128, %s189
        %s191 = smul.u32 3, %s17
        %s192 = ssub.s32 4, %s191
        %p193 = scmp.lt.s32.totalorder %s192, 3
        %s194 = scalar_select %p193, %s192, 3
        %s195 = smul.u32 128, %s194
        %v196 = vld [vmem:[%s185] sm:$0xff]
        %v197 = vld [vmem:[%s185 + $0x8] sm:$0xff]
        %v198 = vld [vmem:[%s185 + $0x10] sm:$0xff]
        %v199 = vld [vmem:[%s1] sm:$0xff]
        %v200 = vld [vmem:[%s1 + $0x8] sm:$0xff]
        %v201 = vld [vmem:[%s1 + $0x10] sm:$0xff]
        %v202 = vld [vmem:[%s1 + $0x18] sm:$0xff]
        %v203 = vld [vmem:[%s1 + $0x20] sm:$0xff]
        %v204 = vld [vmem:[%s1 + $0x28] sm:$0xff]
        %v205 = vld [vmem:[%s1 + $0x30] sm:$0xff]
        %v206 = vld [vmem:[%s1 + $0x38] sm:$0xff]
        %v207 = vld [vmem:[%s2] sm:$0x1]
        %v209 = vlaneseq
        %v210 = vshrl.u32 %v209, 7
        %v211 = vsub.s32 0, %v210
        %v212 = vrot.slane %v207, %v211
        %vm214 = vcmask 523264
        %v216 = vsel %vm214, %v196, 0
        %v219 = vsel %vm214, %v197, 0
        %v222 = vsel %vm214, %v198, 0
        %224 = vmatprep.subr.mxu0 0.0
        %225 = vmatpush1.msra.mxu0 %v199
        %226 = vmatprep.subr.mxu0 0.0
        %227 = vmatpush1.msra.mxu0 %v200
        %228 = vmatprep.subr.mxu0 0.0
        %229 = vmatpush1.msra.mxu0 %v201
        %230 = vmatprep.subr.mxu0 0.0
        %231 = vmatpush1.msra.mxu0 %v202
        %232 = vmatprep.subr.mxu0 0.0
        %233 = vmatpush1.msra.mxu0 %v203
        %234 = vmatprep.subr.mxu0 0.0
        %235 = vmatpush1.msra.mxu0 %v204
        %236 = vmatprep.subr.mxu0 0.0
        %237 = vmatpush1.msra.mxu0 %v205
        %238 = vmatprep.subr.mxu0 0.0
        %239 = vmatpush1.msra.mxu0 %v206
        %240 = vmatprep.subr.mxu0 0.0
        %241 = vmatpush1.msra.mxu0 0.0
        %242 = vmatprep.subr.mxu0 0.0
        %243 = vmatpush1.msra.mxu0 0.0
        %244 = vmatprep.subr.mxu0 0.0
        %245 = vmatpush1.msra.mxu0 0.0
        %246 = vmatprep.subr.mxu0 0.0
        %247 = vmatpush1.msra.mxu0 0.0
        %248 = vmatprep.subr.mxu0 0.0
        %249 = vmatpush1.msra.mxu0 0.0
        %250 = vmatprep.subr.mxu0 0.0
        %251 = vmatpush1.msra.mxu0 0.0
        %252 = vmatprep.subr.mxu0 0.0
        %253 = vmatpush1.msra.mxu0 0.0
        %254 = vmatprep.subr.mxu0 0.0
        %255 = vmatpush1.msra.mxu0 0.0
        %256 = vmatprep.subr.mxu0 0.0
        %257 = vmatpush1.msra.mxu0 0.0
        %258 = vmatprep.subr.mxu0 0.0
        %259 = vmatpush1.msra.mxu0 0.0
        %260 = vmatprep.subr.mxu0 0.0
        %261 = vmatpush1.msra.mxu0 0.0
        %262 = vmatprep.subr.mxu0 0.0
        %263 = vmatpush1.msra.mxu0 0.0
        %264 = vmatprep.subr.mxu0 0.0
        %265 = vmatpush1.msra.mxu0 0.0
        %266 = vmatprep.subr.mxu0 0.0
        %267 = vmatpush1.msra.mxu0 0.0
        %268 = vmatprep.subr.mxu0 0.0
        %269 = vmatpush1.msra.mxu0 0.0
        %270 = vmatprep.subr.mxu0 0.0
        %271 = vmatpush1.msra.mxu0 0.0
        %272 = vmatprep.subr.mxu0 0.0
        %273 = vmatpush1.msra.mxu0 0.0
        %274 = vmatprep.subr.mxu0 0.0
        %275 = vmatpush1.msra.mxu0 0.0
        %276 = vmatprep.subr.mxu0 0.0
        %277 = vmatpush1.msra.mxu0 0.0
        %278 = vmatprep.subr.mxu0 0.0
        %279 = vmatpush1.msra.mxu0 0.0
        %280 = vmatprep.subr.mxu0 0.0
        %281 = vmatpush1.msra.mxu0 0.0
        %282 = vmatprep.subr.mxu0 0.0
        %283 = vmatpush1.msra.mxu0 0.0
        %284 = vmatprep.subr.mxu0 0.0
        %285 = vmatpush1.msra.mxu0 0.0
        %286 = vmatprep.subr.mxu0 0.0
        %287 = vmatpush1.msra.mxu0 0.0
        %288 = vmatprep.mubr.f32.mxu0 0.0
        %289 = vmatmul.mubr.f32.gmra.mrb[0].mxu0 %v216
        %v290 = vpop.f32.mrb[0].mxu0
        %v291 = vadd.f32 %v212, %v290
        %v292 = vpop.f32.mrb[0].mxu0
        %293 = vmatprep.mubr.f32.mxu0 0.0
        %294 = vmatmul.mubr.f32.gmra.mrb[0].mxu0 %v219
        %v295 = vpop.f32.mrb[0].mxu0
        %v296 = vadd.f32 %v212, %v295
        %v297 = vpop.f32.mrb[0].mxu0
        %298 = vmatprep.mubr.f32.mxu0 0.0
        %299 = vmatmul.mubr.f32.gmra.mrb[0].mxu0 %v222
        %v300 = vpop.f32.mrb[0].mxu0
        %v301 = vadd.f32 %v212, %v300
        %v302 = vpop.f32.mrb[0].mxu0
        %303 = vdwg.mxu0
        %304 = vst [vmem:[%s176] sm:$0xff] %v291
        %305 = vst [vmem:[%s176 + $0x8] sm:$0xff] %v296
        %306 = vst [vmem:[%s176 + $0x10] sm:$0xff] %v301
        %s307 = sand.u32 %s93, 1
        %s308 = scalar_lea.sflag [#allocation3], %s307
        %s309 = sand.u32 %s93, 1
        %s310 = smul.addr %s309, 24
        %s311 = scalar_lea.vmem [#allocation2], %s310
        // Predicated region
        $region33: #{patch_embedding.1} parent=31 // pred_check
          %p312 = pneg %p103
        $region34: #{patch_embedding.1} parent=31 // pred_check_branch
          %314 = sbr.rel (%p312) target = $region36
        $region35: #{patch_embedding.1} parent=31 // pred_region
          %s315 = smul.u32 3, %s17
          %s316 = ssub.s32 4, %s315
          %p317 = scmp.lt.s32.totalorder %s316, 3
          %s318 = scalar_select %p317, %s316, 3
          %s319 = smul.u32 128, %s318
          %s321 = ssub.s32 384, %s319
          %322 = vsyncadd %s308, %s321
          %p323 = scmp.ne.s32.totalorder 0, %s319
          %s324 = smul.addr %s315, 128
          %s325 = scalar_lea.hbm %s3, %s324
          %s326 = smul.u32 8, %s318
          %s327 = sshll.u32 %s311, 4
          %s328 = int_to_ptr.vmem [resolvable:$true] %s327
          %s329 = sshll.u32 %s326, 4
          %333 = dma.vmem_to_hbm [thread:$0]  (%p323), %s328, %s329, %s325, %s308, 128, 128, 8
        $region36: #{patch_embedding.1} parent=31 // pred_fallthru
          _
      $region32: #{patch_embedding.1} parent=5 // pred_fallthru
        _
      %p334 = scmp.le.s32.totalorder 2, %s12
      // Predicated region
      $region37: #{patch_embedding.1} parent=5 // pred_check
        %p335 = pneg %p334
      $region38: #{patch_embedding.1} parent=5 // pred_check_branch
        %337 = sbr.rel (%p335) target = $region40
      $region39: #{patch_embedding.1} parent=5 // pred_region
        %s338 = ssub.s32 %s12, 2
        // Predicated region
        $region41: #{patch_embedding.1} parent=39 // pred_check
          %p339 = pneg %p109
        $region42: #{patch_embedding.1} parent=39 // pred_check_branch
          %341 = sbr.rel (%p339) target = $region44
        $region43: #{patch_embedding.1} parent=39 // pred_region
          %s342 = sand.u32 %s94, 1
          %s343 = scalar_lea.sflag [#allocation3], %s342
          %s344 = sand.u32 %s94, 1
          %s345 = smul.addr %s344, 24
          %s346 = scalar_lea.vmem [#allocation2], %s345
          %347 = dma.done %s343, 384
        $region44: #{patch_embedding.1} parent=39 // pred_fallthru
          _
      $region40: #{patch_embedding.1} parent=5 // pred_fallthru
        _
    $region6: #{patch_embedding.1} parent=1 // loop_footer
      %s16 = sadd.s32 1, %s12
    $region7: #{patch_embedding.1} parent=1 // loop_footer_branch
      %11 = sbr.rel target = $region3
    $region8: #{patch_embedding.1} parent=1 // loop_exit
      _
    %348 = vsyncpa [#allocation3], 1
    %s349 = scalar_lea.sflag [#allocation3], 1
    %350 = vsyncpa %s349, 1

</llo_original>
